<compile_context>
chip_gen: v6e
topology: v6e:2x2x1
jax: 0.10.0
libtpu: 0.0.40
codegen_flags: <defaults>
</compile_context>

<pallas_src>
import functools

import jax
import jax.numpy as jnp
from jax.experimental import pallas as pl
from jax.experimental.pallas import tpu as pltpu

_ALIGN = 16  # batch-tile row alignment; safe for bf16 (16,128) and f32 (8,128) tiling


def _round_up(n, m):
    return (n + m - 1) // m * m


def autosurv_kernel(x_ref, w_ref, b_ref, out_ref, *, D, H1, CO, Hc):
    """Whole Autosurv forward on one batch tile.

    All intermediates are lane-dense [BT, 128] with unused lanes exactly 0
    (guaranteed by zero-padded weight/bias slabs), so the cox-head partial can
    ride along in lanes [CO, CO+Hc) of the shared activation slab.
    """
    relu = lambda v: jnp.maximum(v, 0.0)
    dot = functools.partial(jnp.dot, preferred_element_type=jnp.float32)
    cdt = w_ref.dtype                       # matmul operand dtype (bf16 or f32)
    K2 = _round_up(H1, 8)                   # contraction width, pass 2
    K3 = _round_up(CO + Hc, 8)              # contraction width, passes 3 & 4

    b = b_ref[...]                          # [8, 128] f32 (one vreg tile)

    # pass 1: h1 = relu(x @ We1 + be1)                    lanes [0, H1)
    h1 = relu(dot(x_ref[...], w_ref[0, :D, :]) + b[0:1, :])

    # pass 2: h1 @ [We2 | Wc1a]  ->  h2 pre-act | c1a     lanes [0,H2) | [CO,CO+Hc)
    z = dot(h1[:, :K2].astype(cdt), w_ref[1, :K2, :]) + b[1:2, :]
    # Lane-masked ReLU: mask row (b[4]) is 1.0 on lanes < H2 and 0.0 elsewhere, so
    # h2 lanes are clamped, the carried c1a stays un-clamped, zero lanes stay zero.
    f1 = z - b[4:5, :] * jnp.minimum(z, 0.0)

    # pass 3: f1 @ [Wd1 | Wc1b ; I_Hc carry]  ->  d1 | c1 (both ReLU'd)
    f2 = relu(dot(f1[:, :K3].astype(cdt), w_ref[2, :K3, :]) + b[2:3, :])

    # pass 4: f2 @ [Wd2 | wc2 column at lane D]  ->  x_tilt (lanes 0:D) | cox (lane D)
    # Lands directly in the lane-dense output slab: no VPU/XLU epilogue, full-width
    # unmasked vector stores.
    out = dot(f2[:, :K3].astype(cdt), w_ref[3, :K3, :]) + b[3:4, :]
    out_ref[...] = out.astype(out_ref.dtype)


def _pack_params(params, *, D, H1, H2, Hc, CO, compute_dtype):
    """Pack all PyTorch-convention weights into two lane-padded resident slabs."""
    f32 = jnp.float32

    # Packing invariants (review: assert rather than fail silently).
    assert max(D, H1, H2, Hc) <= 128, "layer widths must fit one lane tile"
    assert D + 1 <= 128, "cox column lives at lane D of the output slab"
    assert CO >= max(H1, H2) and CO + Hc <= 128, "cox lanes must be disjoint"

    def wt(name):                       # torch [out, in] -> [in, out]
        return jnp.asarray(params[name + "_w"], f32).T

    def place(slab, r0, c0, blk):       # put blk at rows r0:, cols c0: of a 128x128 tile
        return slab.at[r0:r0 + blk.shape[0], c0:c0 + blk.shape[1]].set(blk)

    z128 = jnp.zeros((128, 128), f32)
    wc1 = wt("c1")                      # [H1+H2, Hc]; split to fuse the concat

    w0 = place(z128, 0, 0, wt("e1"))                                   # We1
    w1 = place(place(z128, 0, 0, wt("e2")), 0, CO, wc1[:H1])           # We2 | Wc1a
    w2 = place(place(place(z128, 0, 0, wt("d1")), 0, CO, wc1[H1:]),
               CO, CO, jnp.eye(Hc, dtype=f32))                         # Wd1 | Wc1b + I carry
    w3 = place(place(z128, 0, 0, wt("d2")), CO, D, wt("c2"))           # Wd2 | wc2 col @ lane D
    w_slab = jnp.stack([w0, w1, w2, w3]).astype(compute_dtype)         # [4,128,128]

    def row(*pieces):                   # pieces: (lane_offset, vector)
        r = jnp.zeros((128,), f32)
        for off, v in pieces:
            v = jnp.asarray(v, f32).reshape(-1)
            r = r.at[off:off + v.shape[0]].set(v)
        return r

    b_slab = jnp.stack([
        row((0, params["e1_b"])),                               # pass 1 bias
        row((0, params["e2_b"])),                               # pass 2 bias (h2 lanes only)
        row((0, params["d1_b"]), (CO, params["c1_b"])),         # pass 3 bias (d1 | c1)
        row((0, params["d2_b"]), (D, params["c2_b"])),          # pass 4 bias (x_tilt | cox)
        row((0, jnp.ones((H2,), f32))),                         # pass-2 ReLU lane mask
        jnp.zeros((128,), f32),                                 # pad to 8 rows (one vreg)
        jnp.zeros((128,), f32),
        jnp.zeros((128,), f32),
    ])                                                          # [8,128] f32
    return w_slab, b_slab


def autosurv_forward(x, params, *, H1, H2, Hc, max_batch_tile=2048,
                     compute_dtype=jnp.bfloat16):
    """x: [B, D] float32. params: PyTorch-convention dict (W: [out,in], b: [out])."""
    B, D = x.shape
    CO = max(H1, H2)   # lane offset where the cox-head partial rides along

    # Batch tiling: big tiles amortize the ~0.35us/step overhead; force >=2 grid steps
    # for non-trivial B so v7x's two TensorCores both get work ("parallel" axis).
    B_al = _round_up(max(B, 1), _ALIGN)
    n_steps = max(1 if B_al <= _ALIGN else 2, pl.cdiv(B_al, max_batch_tile))
    BT = _round_up(pl.cdiv(B_al, n_steps), _ALIGN)
    B_pad = n_steps * BT
    if B_pad != B:
        x = jnp.pad(x, ((0, B_pad - B), (0, 0)))
    x = x.astype(compute_dtype)   # halves the input DMA in the bf16 path

    w_slab, b_slab = _pack_params(params, D=D, H1=H1, H2=H2, Hc=Hc, CO=CO,
                                  compute_dtype=compute_dtype)

    out = pl.pallas_call(
        functools.partial(autosurv_kernel, D=D, H1=H1, CO=CO, Hc=Hc),
        out_shape=jax.ShapeDtypeStruct((B_pad, 128), compute_dtype),
        grid=(n_steps,),
        in_specs=[
            pl.BlockSpec((BT, D), lambda i: (i, 0)),            # x tile, pipelined over B
            pl.BlockSpec((4, 128, 128), lambda i: (0, 0, 0)),   # weights: resident in VMEM
            pl.BlockSpec((8, 128), lambda i: (0, 0)),           # biases/mask: resident
        ],
        out_specs=pl.BlockSpec((BT, 128), lambda i: (i, 0)),    # lane-dense output slab
        compiler_params=pltpu.CompilerParams(
            dimension_semantics=("parallel",)),                 # v7x: shard batch over 2 TCs
    )(x, w_slab, b_slab)

    # Padded rows [B, B_pad) carry garbage (bias-only cox values) and must be sliced off.
    x_tilt = out[:B, :D].astype(jnp.float32)
    cox = out[:B, D].astype(jnp.float32)                        # .squeeze(1)
    return x_tilt, cox


def init_params(key, encoder_hidden, cox_hidden):
    """Deterministic PyTorch-style init: U(-1/sqrt(fan_in), 1/sqrt(fan_in))."""
    D, H1, H2 = encoder_hidden
    Hc = cox_hidden[0]
    shapes = {
        # encoder
        "e1": (H1, D), "e2": (H2, H1),
        # decoder (reversed hidden sizes), last block no_tail -> no ReLU
        "d1": (H1, H2), "d2": (D, H1),
        # cox: input = sum of last num_out_layers encoder widths = H1 + H2
        "c1": (Hc, H1 + H2), "c2": (1, Hc),
    }
    params = {}
    for name, (out_c, in_c) in shapes.items():
        key, kw, kb = jax.random.split(key, 3)
        bound = 1.0 / (in_c ** 0.5)
        params[name + "_w"] = jax.random.uniform(
            kw, (out_c, in_c), jnp.float32, -bound, bound)
        params[name + "_b"] = jax.random.uniform(
            kb, (out_c,), jnp.float32, -bound, bound)
    return params


def reference_forward(x, params):
    """Pure-JAX reference of the same PyTorch graph (sanity check)."""
    relu = lambda v: jnp.maximum(v, 0.0)
    lin = lambda v, n: v @ params[n + "_w"].T + params[n + "_b"]
    h1 = relu(lin(x, "e1"))
    h2 = relu(lin(h1, "e2"))
    d1 = relu(lin(h2, "d1"))
    x_tilt = lin(d1, "d2")
    y = jnp.concatenate([h1, h2], axis=1)
    c1 = relu(lin(y, "c1"))
    cox = lin(c1, "c2")[:, 0]
    return x_tilt, cox


if __name__ == "__main__":
    B = 8
    encoder_hidden = [32, 16, 8]      # [D, H1, H2]
    cox_hidden = [16, 1]
    D, H1, H2 = encoder_hidden
    Hc = cox_hidden[0]

    key = jax.random.PRNGKey(0)
    key, kx = jax.random.split(key)
    x = jax.random.normal(kx, (B, D), jnp.float32)
    params = init_params(key, encoder_hidden, cox_hidden)

    x_tilt_ref, cox_ref = reference_forward(x, params)

    # f32 matmul path: tight check against the pure-JAX reference.
    x_tilt32, cox32 = autosurv_forward(x, params, H1=H1, H2=H2, Hc=Hc,
                                       compute_dtype=jnp.float32)
    jax.block_until_ready((x_tilt32, cox32))
    assert x_tilt32.shape == (B, D) and cox32.shape == (B,)
    assert jnp.allclose(x_tilt32, x_tilt_ref, atol=1e-4, rtol=1e-4)
    assert jnp.allclose(cox32, cox_ref, atol=1e-4, rtol=1e-4)

    # bf16 matmul path (default perf configuration): loose tolerance vs f32 reference.
    x_tilt_bf, cox_bf = autosurv_forward(x, params, H1=H1, H2=H2, Hc=Hc)
    jax.block_until_ready((x_tilt_bf, cox_bf))
    assert x_tilt_bf.shape == (B, D) and cox_bf.shape == (B,)
    assert jnp.allclose(x_tilt_bf, x_tilt_ref, atol=5e-2, rtol=5e-2)
    assert jnp.allclose(cox_bf, cox_ref, atol=5e-2, rtol=5e-2)

    print("KERNEL_OK")
</pallas_src>

<mosaic_0001>
module attributes {stable_mosaic.version = 11 : i64} {
  func.func @autosurv_kernel(%arg0: i32, %arg1: memref<16x32xf32, #tpu.memory_space<vmem>>, %arg2: memref<4x128x128xf32, #tpu.memory_space<vmem>>, %arg3: memref<8x128xf32, #tpu.memory_space<vmem>>, %arg4: memref<16x128xf32, #tpu.memory_space<vmem>>) attributes {dimension_semantics = [#tpu.dimension_semantics<parallel>], iteration_bounds = array<i64: 1>, scalar_prefetch = 0 : i64, scratch_operands = 0 : i64, tpu.core_type = #tpu.core_type<tc>, window_params = [{transform_indices = @transform_0, window_bounds = array<i64: 16, 32>}, {pipeline_mode = #tpu.pipeline_mode<synchronous>, transform_indices = @transform_1, window_bounds = array<i64: 4, 128, 128>}, {pipeline_mode = #tpu.pipeline_mode<synchronous>, transform_indices = @transform_2, window_bounds = array<i64: 8, 128>}, {transform_indices = @transform_3, window_bounds = array<i64: 16, 128>}]} {
    %c0 = arith.constant 0 : index
    %c0_0 = arith.constant 0 : index
    %0 = vector.load %arg3[%c0, %c0_0] : memref<8x128xf32, #tpu.memory_space<vmem>>, vector<8x128xf32>
    %c0_1 = arith.constant 0 : index
    %c0_2 = arith.constant 0 : index
    %1 = vector.load %arg1[%c0_1, %c0_2] : memref<16x32xf32, #tpu.memory_space<vmem>>, vector<16x32xf32>
    %c0_3 = arith.constant 0 : index
    %c0_4 = arith.constant 0 : index
    %c0_5 = arith.constant 0 : index
    %2 = vector.load %arg2[%c0_3, %c0_4, %c0_5] : memref<4x128x128xf32, #tpu.memory_space<vmem>>, vector<1x32x128xf32>
    %3 = vector.shape_cast %2 : vector<1x32x128xf32> to vector<32x128xf32>
    %cst = arith.constant dense<0.000000e+00> : vector<16x128xf32>
    %4 = tpu.matmul %1, %3, %cst {dimension_numbers = #tpu.dot_dimension_numbers<[1], [0], [0], [1], [0, 0, 1, 1], [], []>} : vector<16x32xf32>, vector<32x128xf32>, vector<16x128xf32> -> vector<16x128xf32>
    %5 = vector.extract_strided_slice %0 {offsets = [0, 0], sizes = [1, 128], strides = [1, 1]} : vector<8x128xf32> to vector<1x128xf32>
    %6 = vector.broadcast %5 : vector<1x128xf32> to vector<16x128xf32>
    %7 = arith.addf %4, %6 : vector<16x128xf32>
    %cst_6 = arith.constant 0.000000e+00 : f32
    %8 = vector.broadcast %cst_6 : f32 to vector<16x128xf32>
    %9 = arith.maximumf %7, %8 : vector<16x128xf32>
    %10 = vector.extract_strided_slice %9 {offsets = [0, 0], sizes = [16, 16], strides = [1, 1]} : vector<16x128xf32> to vector<16x16xf32>
    %c1 = arith.constant 1 : index
    %c0_7 = arith.constant 0 : index
    %c0_8 = arith.constant 0 : index
    %11 = vector.load %arg2[%c1, %c0_7, %c0_8] : memref<4x128x128xf32, #tpu.memory_space<vmem>>, vector<1x16x128xf32>
    %12 = vector.shape_cast %11 : vector<1x16x128xf32> to vector<16x128xf32>
    %cst_9 = arith.constant dense<0.000000e+00> : vector<16x128xf32>
    %13 = tpu.matmul %10, %12, %cst_9 {dimension_numbers = #tpu.dot_dimension_numbers<[1], [0], [0], [1], [0, 0, 1, 1], [], []>} : vector<16x16xf32>, vector<16x128xf32>, vector<16x128xf32> -> vector<16x128xf32>
    %14 = vector.extract_strided_slice %0 {offsets = [1, 0], sizes = [1, 128], strides = [1, 1]} : vector<8x128xf32> to vector<1x128xf32>
    %15 = vector.broadcast %14 : vector<1x128xf32> to vector<16x128xf32>
    %16 = arith.addf %13, %15 : vector<16x128xf32>
    %17 = vector.extract_strided_slice %0 {offsets = [4, 0], sizes = [1, 128], strides = [1, 1]} : vector<8x128xf32> to vector<1x128xf32>
    %cst_10 = arith.constant 0.000000e+00 : f32
    %18 = vector.broadcast %cst_10 : f32 to vector<16x128xf32>
    %19 = arith.minimumf %16, %18 : vector<16x128xf32>
    %20 = vector.broadcast %17 : vector<1x128xf32> to vector<16x128xf32>
    %21 = arith.mulf %20, %19 : vector<16x128xf32>
    %22 = arith.subf %16, %21 : vector<16x128xf32>
    %23 = vector.extract_strided_slice %22 {offsets = [0, 0], sizes = [16, 32], strides = [1, 1]} : vector<16x128xf32> to vector<16x32xf32>
    %c2 = arith.constant 2 : index
    %c0_11 = arith.constant 0 : index
    %c0_12 = arith.constant 0 : index
    %24 = vector.load %arg2[%c2, %c0_11, %c0_12] : memref<4x128x128xf32, #tpu.memory_space<vmem>>, vector<1x32x128xf32>
    %25 = vector.shape_cast %24 : vector<1x32x128xf32> to vector<32x128xf32>
    %cst_13 = arith.constant dense<0.000000e+00> : vector<16x128xf32>
    %26 = tpu.matmul %23, %25, %cst_13 {dimension_numbers = #tpu.dot_dimension_numbers<[1], [0], [0], [1], [0, 0, 1, 1], [], []>} : vector<16x32xf32>, vector<32x128xf32>, vector<16x128xf32> -> vector<16x128xf32>
    %27 = vector.extract_strided_slice %0 {offsets = [2, 0], sizes = [1, 128], strides = [1, 1]} : vector<8x128xf32> to vector<1x128xf32>
    %28 = vector.broadcast %27 : vector<1x128xf32> to vector<16x128xf32>
    %29 = arith.addf %26, %28 : vector<16x128xf32>
    %cst_14 = arith.constant 0.000000e+00 : f32
    %30 = vector.broadcast %cst_14 : f32 to vector<16x128xf32>
    %31 = arith.maximumf %29, %30 : vector<16x128xf32>
    %32 = vector.extract_strided_slice %31 {offsets = [0, 0], sizes = [16, 32], strides = [1, 1]} : vector<16x128xf32> to vector<16x32xf32>
    %c3 = arith.constant 3 : index
    %c0_15 = arith.constant 0 : index
    %c0_16 = arith.constant 0 : index
    %33 = vector.load %arg2[%c3, %c0_15, %c0_16] : memref<4x128x128xf32, #tpu.memory_space<vmem>>, vector<1x32x128xf32>
    %34 = vector.shape_cast %33 : vector<1x32x128xf32> to vector<32x128xf32>
    %cst_17 = arith.constant dense<0.000000e+00> : vector<16x128xf32>
    %35 = tpu.matmul %32, %34, %cst_17 {dimension_numbers = #tpu.dot_dimension_numbers<[1], [0], [0], [1], [0, 0, 1, 1], [], []>} : vector<16x32xf32>, vector<32x128xf32>, vector<16x128xf32> -> vector<16x128xf32>
    %36 = vector.extract_strided_slice %0 {offsets = [3, 0], sizes = [1, 128], strides = [1, 1]} : vector<8x128xf32> to vector<1x128xf32>
    %37 = vector.broadcast %36 : vector<1x128xf32> to vector<16x128xf32>
    %38 = arith.addf %35, %37 : vector<16x128xf32>
    %c0_18 = arith.constant 0 : index
    %c0_19 = arith.constant 0 : index
    %39 = vector.load %arg4[%c0_18, %c0_19] : memref<16x128xf32, #tpu.memory_space<vmem>>, vector<16x128xf32>
    tpu.vector_store %arg4[%c0_18, %c0_19], %38 {strides = array<i32>} : memref<16x128xf32, #tpu.memory_space<vmem>>, vector<16x128xf32>,
    return
  }
  func.func @transform_0(%arg0: i32) -> (i32, i32) {
    %c0_i32 = arith.constant 0 : i32
    %c0_i32_0 = arith.constant 0 : i32
    return %arg0, %c0_i32 : i32, i32
  }
  func.func @transform_1(%arg0: i32) -> (i32, i32, i32) {
    %c0_i32 = arith.constant 0 : i32
    %c0_i32_0 = arith.constant 0 : i32
    %c0_i32_1 = arith.constant 0 : i32
    %c0_i32_2 = arith.constant 0 : i32
    return %c0_i32, %c0_i32_0, %c0_i32_1 : i32, i32, i32
  }
  func.func @transform_2(%arg0: i32) -> (i32, i32) {
    %c0_i32 = arith.constant 0 : i32
    %c0_i32_0 = arith.constant 0 : i32
    %c0_i32_1 = arith.constant 0 : i32
    return %c0_i32, %c0_i32_0 : i32, i32
  }
  func.func @transform_3(%arg0: i32) -> (i32, i32) {
    %c0_i32 = arith.constant 0 : i32
    %c0_i32_0 = arith.constant 0 : i32
    return %arg0, %c0_i32 : i32, i32
  }
}

</mosaic_0001>

<llo_original>
// kernel: tpu_custom_call.1
$region0: #{tpu_custom_call.1}
  #allocation0 [shape = 'u32[]', space=smem, size = 0x4, offset = 0x4, fixed_abs, tag = 'smem constant byte address 0x4 - core index']
  #allocation1 [shape = 'u32[144,128]{1,0:T(1,128)}', space=vmem, size = 0x12000, scoped, tag = 'internal scratch']
  %s0 = inlined_call_operand.hbm [shape: f32[16,32], index: 0, kind: input, shape index: {}]
  %s1 = inlined_call_operand.hbm [shape: f32[4,128,128], index: 1, kind: input, shape index: {}]
  %s2 = inlined_call_operand.hbm [shape: f32[8,128], index: 2, kind: input, shape index: {}]
  %s3 = inlined_call_operand.hbm [shape: f32[16,128], index: 3, kind: output, shape index: {}]
  %s4 = sld [smem:[#allocation0]]
  $region34: #{tpu_custom_call.1} parent=0
    _
  %s6 = ssub.s32 1, %s4
  %s7 = scalar_select 0, %s6, %s4
  $region1: #{tpu_custom_call.1} parent=0
    #allocation2 [shape = 'u8[8192]{0}', space=vmem, size = 0x2000, scoped, tag = 'input window, operand 0, single buffered']
    #allocation3 [shape = 's32[1]{0}', space=sflag, size = 0x4, scoped, tag = 'scoped memory for tpu_custom_call.1']
    #allocation4 [shape = 's32[1]{0}', space=sflag, size = 0x4, scoped, tag = 'scoped memory for tpu_custom_call.1']
    #allocation5 [shape = 'u8[262144]{0}', space=vmem, size = 0x40000, scoped, tag = 'input window, operand 1, single buffered']
    #allocation6 [shape = 's32[1]{0}', space=sflag, size = 0x4, scoped, tag = 'scoped memory for tpu_custom_call.1']
    #allocation7 [shape = 'u8[4096]{0}', space=vmem, size = 0x1000, scoped, tag = 'input window, operand 2, single buffered']
    #allocation8 [shape = 'u8[8192]{0}', space=vmem, size = 0x2000, scoped, tag = 'output window, operand 0, single buffered']
    %8 = vsyncpa [#allocation3], 0
    %9 = vsyncpa [#allocation6], 0
    %10 = vsyncpa [#allocation4], 0
    // Predicated region
    $region2: #{tpu_custom_call.1} parent=1 // pred_check
      _
    $region3: #{tpu_custom_call.1} parent=1 // pred_check_branch
      %12 = sbr.rel (0) target = $region5
    $region4: #{tpu_custom_call.1} parent=1 // pred_region
      %s14 = ssub.s32 256, 256
      %15 = vsyncadd [#allocation3], %s14
      %s16 = sshll.u32 [#allocation2], 4
      %s17 = int_to_ptr.vmem [resolvable:$true] %s16
      %22 = dma.hbm_to_vmem [thread:$0]  %s0, 256, %s17, [#allocation3], 128, 128, 8
    $region5: #{tpu_custom_call.1} parent=1 // pred_fallthru
      _
    // Predicated region
    $region6: #{tpu_custom_call.1} parent=1 // pred_check
      _
    $region7: #{tpu_custom_call.1} parent=1 // pred_check_branch
      %24 = sbr.rel (0) target = $region9
    $region8: #{tpu_custom_call.1} parent=1 // pred_region
      %s26 = ssub.s32 8192, 8192
      %27 = vsyncadd [#allocation6], %s26
      %s28 = sshll.u32 [#allocation5], 4
      %s29 = int_to_ptr.vmem [resolvable:$true] %s28
      %34 = dma.hbm_to_vmem [thread:$0]  %s1, 8192, %s29, [#allocation6], 128, 128, 8
    $region9: #{tpu_custom_call.1} parent=1 // pred_fallthru
      _
    // Predicated region
    $region10: #{tpu_custom_call.1} parent=1 // pred_check
      _
    $region11: #{tpu_custom_call.1} parent=1 // pred_check_branch
      %36 = sbr.rel (0) target = $region13
    $region12: #{tpu_custom_call.1} parent=1 // pred_region
      %s38 = ssub.s32 128, 128
      %39 = vsyncadd [#allocation6], %s38
      %s41 = sshll.u32 [#allocation7], 4
      %s42 = int_to_ptr.vmem [resolvable:$true] %s41
      %44 = dma.hbm_to_vmem [thread:$0]  %s2, 128, %s42, [#allocation6]
    $region13: #{tpu_custom_call.1} parent=1 // pred_fallthru
      _
    // Predicated region
    $region14: #{tpu_custom_call.1} parent=1 // pred_check
      _
    $region15: #{tpu_custom_call.1} parent=1 // pred_check_branch
      %46 = sbr.rel (0) target = $region17
    $region16: #{tpu_custom_call.1} parent=1 // pred_region
      %47 = dma.done [#allocation3], 256
    $region17: #{tpu_custom_call.1} parent=1 // pred_fallthru
      _
    // Predicated region
    $region18: #{tpu_custom_call.1} parent=1 // pred_check
      _
    $region19: #{tpu_custom_call.1} parent=1 // pred_check_branch
      %49 = sbr.rel (0) target = $region21
    $region20: #{tpu_custom_call.1} parent=1 // pred_region
      %50 = dma.done [#allocation6], 8192
    $region21: #{tpu_custom_call.1} parent=1 // pred_fallthru
      _
    // Predicated region
    $region22: #{tpu_custom_call.1} parent=1 // pred_check
      _
    $region23: #{tpu_custom_call.1} parent=1 // pred_check_branch
      %52 = sbr.rel (0) target = $region25
    $region24: #{tpu_custom_call.1} parent=1 // pred_region
      %53 = dma.done [#allocation6], 128
    $region25: #{tpu_custom_call.1} parent=1 // pred_fallthru
      _
    %v54 = vld [vmem:[#allocation7] sm:$0xff]
    %v55 = vld [vmem:[#allocation2] sm:$0xff]
    %v56 = vld [vmem:[#allocation2 + $0x8] sm:$0xff]
    %v57 = vld [vmem:[#allocation5] sm:$0xff]
    %v58 = vld [vmem:[#allocation5 + $0x8] sm:$0xff]
    %v59 = vld [vmem:[#allocation5 + $0x10] sm:$0xff]
    %v60 = vld [vmem:[#allocation5 + $0x18] sm:$0xff]
    %v61 = vlaneseq
    %v62 = vshrl.u32 %v61, 7
    %v63 = vsub.s32 0, %v62
    %v64 = vrot.slane %v54, %v63
    %vm65 = vcmask 261120
    %v67 = vsel %vm65, %v55, 0
    %v70 = vsel %vm65, %v56, 0
    %72 = vmatprep.subr.mxu0 0.0
    %73 = vmatpush1.msra.mxu0 0.0
    %74 = vmatprep.subr.mxu0 0.0
    %75 = vmatpush1.msra.mxu0 0.0
    %76 = vmatprep.subr.mxu0 0.0
    %77 = vmatpush1.msra.mxu0 0.0
    %78 = vmatprep.subr.mxu0 0.0
    %79 = vmatpush1.msra.mxu0 0.0
    %80 = vmatprep.subr.mxu0 0.0
    %81 = vmatpush1.msra.mxu0 0.0
    %82 = vmatprep.subr.mxu0 0.0
    %83 = vmatpush1.msra.mxu0 0.0
    %84 = vmatprep.subr.mxu0 0.0
    %85 = vmatpush1.msra.mxu0 0.0
    %86 = vmatprep.subr.mxu0 0.0
    %87 = vmatpush1.msra.mxu0 0.0
    %88 = vmatprep.subr.mxu0 0.0
    %89 = vmatpush1.msra.mxu0 0.0
    %90 = vmatprep.subr.mxu0 0.0
    %91 = vmatpush1.msra.mxu0 0.0
    %92 = vmatprep.subr.mxu0 0.0
    %93 = vmatpush1.msra.mxu0 0.0
    %94 = vmatprep.subr.mxu0 0.0
    %95 = vmatpush1.msra.mxu0 0.0
    %96 = vmatprep.subr.mxu0 0.0
    %97 = vmatpush1.msra.mxu0 %v60
    %98 = vmatprep.subr.mxu0 0.0
    %99 = vmatpush1.msra.mxu0 %v59
    %100 = vmatprep.subr.mxu0 0.0
    %101 = vmatpush1.msra.mxu0 %v58
    %102 = vmatprep.subr.mxu0 0.0
    %103 = vmatpush1.msra.mxu0 %v57
    %104 = vmatprep.subr.mxu0 0.0
    %105 = vmatpush2.msra.mxu0 0.0
    %106 = vmatprep.subr.mxu0 0.0
    %107 = vmatpush2.msra.mxu0 0.0
    %108 = vmatprep.subr.mxu0 0.0
    %109 = vmatpush2.msra.mxu0 0.0
    %110 = vmatprep.subr.mxu0 0.0
    %111 = vmatpush2.msra.mxu0 0.0
    %112 = vmatprep.subr.mxu0 0.0
    %113 = vmatpush2.msra.mxu0 0.0
    %114 = vmatprep.subr.mxu0 0.0
    %115 = vmatpush2.msra.mxu0 0.0
    %116 = vmatprep.subr.mxu0 0.0
    %117 = vmatpush2.msra.mxu0 0.0
    %118 = vmatprep.subr.mxu0 0.0
    %119 = vmatpush2.msra.mxu0 0.0
    %120 = vmatprep.subr.mxu0 0.0
    %121 = vmatpush2.msra.mxu0 0.0
    %122 = vmatprep.subr.mxu0 0.0
    %123 = vmatpush2.msra.mxu0 0.0
    %124 = vmatprep.subr.mxu0 0.0
    %125 = vmatpush2.msra.mxu0 0.0
    %126 = vmatprep.subr.mxu0 0.0
    %127 = vmatpush2.msra.mxu0 0.0
    %128 = vmatprep.subr.mxu0 0.0
    %129 = vmatpush2.msra.mxu0 0.0
    %130 = vmatprep.subr.mxu0 0.0
    %131 = vmatpush2.msra.mxu0 0.0
    %132 = vmatprep.subr.mxu0 0.0
    %133 = vmatpush2.msra.mxu0 0.0
    %134 = vmatprep.subr.mxu0 0.0
    %135 = vmatpush2.msra.mxu0 0.0
    %136 = vmatprep.mubr.f32.mxu0 0.0
    %137 = vmatmul.mubr.f32.gmra.mxu0 %v67
    %v138 = vpop.f32.mrf.mxu0
    %v139 = vadd.f32 %v64, %v138
    %v140 = vpop.f32.mrf.mxu0
    %141 = vmatprep.mubr.f32.mxu0 0.0
    %142 = vmatmul.mubr.f32.gmra.mxu0 %v70
    %v143 = vpop.f32.mrf.mxu0
    %v144 = vadd.f32 %v64, %v143
    %v145 = vpop.f32.mrf.mxu0
    %146 = vdwg.mxu0
    %v147 = vmax.f32 %v139, 0.0
    %v148 = vmax.f32 %v144, 0.0
    %s149 = scalar_lea.vmem [#allocation5], 128
    %v150 = vld [vmem:[%s149] sm:$0xff]
    %v151 = vld [vmem:[%s149 + $0x8] sm:$0xff]
    %v152 = vlaneseq
    %v153 = vshrl.u32 %v152, 7
    %v154 = vsub.s32 1, %v153
    %v155 = vrot.slane %v54, %v154
    %vm156 = vcmask 130048
    %v158 = vsel %vm156, %v147, 0
    %v161 = vsel %vm156, %v148, 0
    %163 = vmatprep.subr.mxu0 0.0
    %164 = vmatpush1.msra.mxu0 0.0
    %165 = vmatprep.subr.mxu0 0.0
    %166 = vmatpush1.msra.mxu0 0.0
    %167 = vmatprep.subr.mxu0 0.0
    %168 = vmatpush1.msra.mxu0 0.0
    %169 = vmatprep.subr.mxu0 0.0
    %170 = vmatpush1.msra.mxu0 0.0
    %171 = vmatprep.subr.mxu0 0.0
    %172 = vmatpush1.msra.mxu0 0.0
    %173 = vmatprep.subr.mxu0 0.0
    %174 = vmatpush1.msra.mxu0 0.0
    %175 = vmatprep.subr.mxu0 0.0
    %176 = vmatpush1.msra.mxu0 0.0
    %177 = vmatprep.subr.mxu0 0.0
    %178 = vmatpush1.msra.mxu0 0.0
    %179 = vmatprep.subr.mxu0 0.0
    %180 = vmatpush1.msra.mxu0 0.0
    %181 = vmatprep.subr.mxu0 0.0
    %182 = vmatpush1.msra.mxu0 0.0
    %183 = vmatprep.subr.mxu0 0.0
    %184 = vmatpush1.msra.mxu0 0.0
    %185 = vmatprep.subr.mxu0 0.0
    %186 = vmatpush1.msra.mxu0 0.0
    %187 = vmatprep.subr.mxu0 0.0
    %188 = vmatpush1.msra.mxu0 0.0
    %189 = vmatprep.subr.mxu0 0.0
    %190 = vmatpush1.msra.mxu0 0.0
    %191 = vmatprep.subr.mxu0 0.0
    %192 = vmatpush1.msra.mxu0 %v151
    %193 = vmatprep.subr.mxu0 0.0
    %194 = vmatpush1.msra.mxu0 %v150
    %195 = vmatprep.subr.mxu0 0.0
    %196 = vmatpush2.msra.mxu0 0.0
    %197 = vmatprep.subr.mxu0 0.0
    %198 = vmatpush2.msra.mxu0 0.0
    %199 = vmatprep.subr.mxu0 0.0
    %200 = vmatpush2.msra.mxu0 0.0
    %201 = vmatprep.subr.mxu0 0.0
    %202 = vmatpush2.msra.mxu0 0.0
    %203 = vmatprep.subr.mxu0 0.0
    %204 = vmatpush2.msra.mxu0 0.0
    %205 = vmatprep.subr.mxu0 0.0
    %206 = vmatpush2.msra.mxu0 0.0
    %207 = vmatprep.subr.mxu0 0.0
    %208 = vmatpush2.msra.mxu0 0.0
    %209 = vmatprep.subr.mxu0 0.0
    %210 = vmatpush2.msra.mxu0 0.0
    %211 = vmatprep.subr.mxu0 0.0
    %212 = vmatpush2.msra.mxu0 0.0
    %213 = vmatprep.subr.mxu0 0.0
    %214 = vmatpush2.msra.mxu0 0.0
    %215 = vmatprep.subr.mxu0 0.0
    %216 = vmatpush2.msra.mxu0 0.0
    %217 = vmatprep.subr.mxu0 0.0
    %218 = vmatpush2.msra.mxu0 0.0
    %219 = vmatprep.subr.mxu0 0.0
    %220 = vmatpush2.msra.mxu0 0.0
    %221 = vmatprep.subr.mxu0 0.0
    %222 = vmatpush2.msra.mxu0 0.0
    %223 = vmatprep.subr.mxu0 0.0
    %224 = vmatpush2.msra.mxu0 0.0
    %225 = vmatprep.subr.mxu0 0.0
    %226 = vmatpush2.msra.mxu0 0.0
    %227 = vmatprep.mubr.f32.mxu0 0.0
    %228 = vmatmul.mubr.f32.gmra.mxu0 %v158
    %v229 = vpop.f32.mrf.mxu0
    %v230 = vadd.f32 %v155, %v229
    %v231 = vpop.f32.mrf.mxu0
    %232 = vmatprep.mubr.f32.mxu0 0.0
    %233 = vmatmul.mubr.f32.gmra.mxu0 %v161
    %v234 = vpop.f32.mrf.mxu0
    %v235 = vadd.f32 %v155, %v234
    %v236 = vpop.f32.mrf.mxu0
    %237 = vdwg.mxu0
    %v238 = vmin.f32 %v230, 0.0
    %v239 = vmin.f32 %v235, 0.0
    %v240 = vlaneseq
    %v241 = vshrl.u32 %v240, 7
    %v242 = vsub.s32 4, %v241
    %v243 = vrot.slane %v54, %v242
    %v244 = vmul.f32 %v243, %v238
    %v245 = vmul.f32 %v243, %v239
    %v246 = vsub.f32 %v230, %v244
    %v247 = vsub.f32 %v235, %v245
    %s248 = scalar_lea.vmem [#allocation5], 256
    %v249 = vld [vmem:[%s248] sm:$0xff]
    %v250 = vld [vmem:[%s248 + $0x8] sm:$0xff]
    %v251 = vld [vmem:[%s248 + $0x10] sm:$0xff]
    %v252 = vld [vmem:[%s248 + $0x18] sm:$0xff]
    %v253 = vlaneseq
    %v254 = vshrl.u32 %v253, 7
    %v255 = vsub.s32 2, %v254
    %v256 = vrot.slane %v54, %v255
    %v258 = vsel %vm65, %v246, 0
    %v261 = vsel %vm65, %v247, 0
    %263 = vmatprep.subr.mxu0 0.0
    %264 = vmatpush1.msra.mxu0 0.0
    %265 = vmatprep.subr.mxu0 0.0
    %266 = vmatpush1.msra.mxu0 0.0
    %267 = vmatprep.subr.mxu0 0.0
    %268 = vmatpush1.msra.mxu0 0.0
    %269 = vmatprep.subr.mxu0 0.0
    %270 = vmatpush1.msra.mxu0 0.0
    %271 = vmatprep.subr.mxu0 0.0
    %272 = vmatpush1.msra.mxu0 0.0
    %273 = vmatprep.subr.mxu0 0.0
    %274 = vmatpush1.msra.mxu0 0.0
    %275 = vmatprep.subr.mxu0 0.0
    %276 = vmatpush1.msra.mxu0 0.0
    %277 = vmatprep.subr.mxu0 0.0
    %278 = vmatpush1.msra.mxu0 0.0
    %279 = vmatprep.subr.mxu0 0.0
    %280 = vmatpush1.msra.mxu0 0.0
    %281 = vmatprep.subr.mxu0 0.0
    %282 = vmatpush1.msra.mxu0 0.0
    %283 = vmatprep.subr.mxu0 0.0
    %284 = vmatpush1.msra.mxu0 0.0
    %285 = vmatprep.subr.mxu0 0.0
    %286 = vmatpush1.msra.mxu0 0.0
    %287 = vmatprep.subr.mxu0 0.0
    %288 = vmatpush1.msra.mxu0 %v252
    %289 = vmatprep.subr.mxu0 0.0
    %290 = vmatpush1.msra.mxu0 %v251
    %291 = vmatprep.subr.mxu0 0.0
    %292 = vmatpush1.msra.mxu0 %v250
    %293 = vmatprep.subr.mxu0 0.0
    %294 = vmatpush1.msra.mxu0 %v249
    %295 = vmatprep.subr.mxu0 0.0
    %296 = vmatpush2.msra.mxu0 0.0
    %297 = vmatprep.subr.mxu0 0.0
    %298 = vmatpush2.msra.mxu0 0.0
    %299 = vmatprep.subr.mxu0 0.0
    %300 = vmatpush2.msra.mxu0 0.0
    %301 = vmatprep.subr.mxu0 0.0
    %302 = vmatpush2.msra.mxu0 0.0
    %303 = vmatprep.subr.mxu0 0.0
    %304 = vmatpush2.msra.mxu0 0.0
    %305 = vmatprep.subr.mxu0 0.0
    %306 = vmatpush2.msra.mxu0 0.0
    %307 = vmatprep.subr.mxu0 0.0
    %308 = vmatpush2.msra.mxu0 0.0
    %309 = vmatprep.subr.mxu0 0.0
    %310 = vmatpush2.msra.mxu0 0.0
    %311 = vmatprep.subr.mxu0 0.0
    %312 = vmatpush2.msra.mxu0 0.0
    %313 = vmatprep.subr.mxu0 0.0
    %314 = vmatpush2.msra.mxu0 0.0
    %315 = vmatprep.subr.mxu0 0.0
    %316 = vmatpush2.msra.mxu0 0.0
    %317 = vmatprep.subr.mxu0 0.0
    %318 = vmatpush2.msra.mxu0 0.0
    %319 = vmatprep.subr.mxu0 0.0
    %320 = vmatpush2.msra.mxu0 0.0
    %321 = vmatprep.subr.mxu0 0.0
    %322 = vmatpush2.msra.mxu0 0.0
    %323 = vmatprep.subr.mxu0 0.0
    %324 = vmatpush2.msra.mxu0 0.0
    %325 = vmatprep.subr.mxu0 0.0
    %326 = vmatpush2.msra.mxu0 0.0
    %327 = vmatprep.mubr.f32.mxu0 0.0
    %328 = vmatmul.mubr.f32.gmra.mxu0 %v258
    %v329 = vpop.f32.mrf.mxu0
    %v330 = vadd.f32 %v256, %v329
    %v331 = vpop.f32.mrf.mxu0
    %332 = vmatprep.mubr.f32.mxu0 0.0
    %333 = vmatmul.mubr.f32.gmra.mxu0 %v261
    %v334 = vpop.f32.mrf.mxu0
    %v335 = vadd.f32 %v256, %v334
    %v336 = vpop.f32.mrf.mxu0
    %337 = vdwg.mxu0
    %v338 = vmax.f32 %v330, 0.0
    %v339 = vmax.f32 %v335, 0.0
    %s340 = scalar_lea.vmem [#allocation5], 384
    %v341 = vld [vmem:[%s340] sm:$0xff]
    %v342 = vld [vmem:[%s340 + $0x8] sm:$0xff]
    %v343 = vld [vmem:[%s340 + $0x10] sm:$0xff]
    %v344 = vld [vmem:[%s340 + $0x18] sm:$0xff]
    %v345 = vlaneseq
    %v346 = vshrl.u32 %v345, 7
    %v347 = vsub.s32 3, %v346
    %v348 = vrot.slane %v54, %v347
    %v350 = vsel %vm65, %v338, 0
    %v353 = vsel %vm65, %v339, 0
    %355 = vmatprep.subr.mxu0 0.0
    %356 = vmatpush1.msra.mxu0 0.0
    %357 = vmatprep.subr.mxu0 0.0
    %358 = vmatpush1.msra.mxu0 0.0
    %359 = vmatprep.subr.mxu0 0.0
    %360 = vmatpush1.msra.mxu0 0.0
    %361 = vmatprep.subr.mxu0 0.0
    %362 = vmatpush1.msra.mxu0 0.0
    %363 = vmatprep.subr.mxu0 0.0
    %364 = vmatpush1.msra.mxu0 0.0
    %365 = vmatprep.subr.mxu0 0.0
    %366 = vmatpush1.msra.mxu0 0.0
    %367 = vmatprep.subr.mxu0 0.0
    %368 = vmatpush1.msra.mxu0 0.0
    %369 = vmatprep.subr.mxu0 0.0
    %370 = vmatpush1.msra.mxu0 0.0
    %371 = vmatprep.subr.mxu0 0.0
    %372 = vmatpush1.msra.mxu0 0.0
    %373 = vmatprep.subr.mxu0 0.0
    %374 = vmatpush1.msra.mxu0 0.0
    %375 = vmatprep.subr.mxu0 0.0
    %376 = vmatpush1.msra.mxu0 0.0
    %377 = vmatprep.subr.mxu0 0.0
    %378 = vmatpush1.msra.mxu0 0.0
    %379 = vmatprep.subr.mxu0 0.0
    %380 = vmatpush1.msra.mxu0 %v344
    %381 = vmatprep.subr.mxu0 0.0
    %382 = vmatpush1.msra.mxu0 %v343
    %383 = vmatprep.subr.mxu0 0.0
    %384 = vmatpush1.msra.mxu0 %v342
    %385 = vmatprep.subr.mxu0 0.0
    %386 = vmatpush1.msra.mxu0 %v341
    %387 = vmatprep.subr.mxu0 0.0
    %388 = vmatpush2.msra.mxu0 0.0
    %389 = vmatprep.subr.mxu0 0.0
    %390 = vmatpush2.msra.mxu0 0.0
    %391 = vmatprep.subr.mxu0 0.0
    %392 = vmatpush2.msra.mxu0 0.0
    %393 = vmatprep.subr.mxu0 0.0
    %394 = vmatpush2.msra.mxu0 0.0
    %395 = vmatprep.subr.mxu0 0.0
    %396 = vmatpush2.msra.mxu0 0.0
    %397 = vmatprep.subr.mxu0 0.0
    %398 = vmatpush2.msra.mxu0 0.0
    %399 = vmatprep.subr.mxu0 0.0
    %400 = vmatpush2.msra.mxu0 0.0
    %401 = vmatprep.subr.mxu0 0.0
    %402 = vmatpush2.msra.mxu0 0.0
    %403 = vmatprep.subr.mxu0 0.0
    %404 = vmatpush2.msra.mxu0 0.0
    %405 = vmatprep.subr.mxu0 0.0
    %406 = vmatpush2.msra.mxu0 0.0
    %407 = vmatprep.subr.mxu0 0.0
    %408 = vmatpush2.msra.mxu0 0.0
    %409 = vmatprep.subr.mxu0 0.0
    %410 = vmatpush2.msra.mxu0 0.0
    %411 = vmatprep.subr.mxu0 0.0
    %412 = vmatpush2.msra.mxu0 0.0
    %413 = vmatprep.subr.mxu0 0.0
    %414 = vmatpush2.msra.mxu0 0.0
    %415 = vmatprep.subr.mxu0 0.0
    %416 = vmatpush2.msra.mxu0 0.0
    %417 = vmatprep.subr.mxu0 0.0
    %418 = vmatpush2.msra.mxu0 0.0
    %419 = vmatprep.mubr.f32.mxu0 0.0
    %420 = vmatmul.mubr.f32.gmra.mxu0 %v350
    %v421 = vpop.f32.mrf.mxu0
    %v422 = vadd.f32 %v348, %v421
    %v423 = vpop.f32.mrf.mxu0
    %424 = vmatprep.mubr.f32.mxu0 0.0
    %425 = vmatmul.mubr.f32.gmra.mxu0 %v353
    %v426 = vpop.f32.mrf.mxu0
    %v427 = vadd.f32 %v348, %v426
    %v428 = vpop.f32.mrf.mxu0
    %429 = vdwg.mxu0
    %430 = vst [vmem:[#allocation8] sm:$0xff] %v422
    %431 = vst [vmem:[#allocation8 + $0x8] sm:$0xff] %v427
    // Predicated region
    $region26: #{tpu_custom_call.1} parent=1 // pred_check
      _
    $region27: #{tpu_custom_call.1} parent=1 // pred_check_branch
      %433 = sbr.rel (0) target = $region29
    $region28: #{tpu_custom_call.1} parent=1 // pred_region
      %s435 = ssub.s32 256, 256
      %436 = vsyncadd [#allocation4], %s435
      %s437 = sshll.u32 [#allocation8], 4
      %s438 = int_to_ptr.vmem [resolvable:$true] %s437
      %443 = dma.vmem_to_hbm [thread:$0]  %s438, 256, %s3, [#allocation4], 128, 128, 8
    $region29: #{tpu_custom_call.1} parent=1 // pred_fallthru
      _
    // Predicated region
    $region30: #{tpu_custom_call.1} parent=1 // pred_check
      _
    $region31: #{tpu_custom_call.1} parent=1 // pred_check_branch
      %445 = sbr.rel (0) target = $region33
    $region32: #{tpu_custom_call.1} parent=1 // pred_region
      %446 = dma.done [#allocation4], 256
    $region33: #{tpu_custom_call.1} parent=1 // pred_fallthru
      _
    %447 = vsyncpa [#allocation3], 1
    %448 = vsyncpa [#allocation6], 1
    %449 = vsyncpa [#allocation4], 1

</llo_original>
